<compile_context>
chip_gen: v6e
topology: v6e:2x2x1
jax: 0.10.0
libtpu: 0.0.40
codegen_flags: <defaults>
</compile_context>

<pallas_src>
import jax
import jax.numpy as jnp
from jax.experimental import pallas as pl
from jax.experimental.pallas import tpu as pltpu

SCALE = 200.0            # self.max in the PyTorch module
IN_FEATURES = 2
LAYERS = [32, 32, 32, 1]
PACK = 8                 # samples per sublane row; PACK*32 = 256 (v6e/v7x MXU width)


def _mlp_kernel(x_ref,
                w1_ref, b1_ref,
                w2_ref, b2_ref,
                w3_ref, b3_ref,
                w4_ref, b4_ref,
                o_ref):
    """One row tile: x (TR, P*2) -> o (TR, P).

    Weights are pre-folded (sigmoid affines + x200 scale absorbed) and packed
    block-diagonally, so each layer is a single weight-stationary MXU matmul
    followed by a tanh on the EUP."""
    cdt = w2_ref.dtype          # bf16 (default) or f32 dot-input dtype

    x = x_ref[...].astype(cdt)                                           # (TR, 16)
    h = jnp.tanh(jnp.dot(x, w1_ref[...],
                         preferred_element_type=jnp.float32) + b1_ref[...])
    h = jnp.tanh(jnp.dot(h.astype(cdt), w2_ref[...],
                         preferred_element_type=jnp.float32) + b2_ref[...])
    h = jnp.tanh(jnp.dot(h.astype(cdt), w3_ref[...],
                         preferred_element_type=jnp.float32) + b3_ref[...])
    y = jnp.dot(h.astype(cdt), w4_ref[...],
                preferred_element_type=jnp.float32) + b4_ref[...]        # (TR, P)
    o_ref[...] = y.astype(o_ref.dtype)


def pack_params(params, *, pack=PACK, use_bf16=True):
    """Fold sigmoid affines + the x200 scale into the weights and build the
    block-diagonal, weight-stationary operands for the P-sample packed layout.

    params: [(W, b)] * 4 with W shaped (out, in) and b shaped (out,) (or (out,1)),
            exactly like nn.Linear. Returns 8 arrays (W1..b4) for the kernel.
    """
    (w1, b1), (w2, b2), (w3, b3), (w4, b4) = [(w, b.reshape(-1)) for (w, b) in params]

    # sigmoid(z) = 0.5*tanh(0.5 z) + 0.5 : fold the 0.5 pre/post affines so the
    # kernel only applies tanh; fold SCALE into the output layer.
    w1f, b1f = 0.5 * w1, 0.5 * b1
    w2f, b2f = 0.25 * w2, 0.25 * jnp.sum(w2, axis=1) + 0.5 * b2
    w3f, b3f = 0.25 * w3, 0.25 * jnp.sum(w3, axis=1) + 0.5 * b3
    w4f, b4f = (0.5 * SCALE) * w4, SCALE * (0.5 * jnp.sum(w4, axis=1) + b4)

    wdt = jnp.bfloat16 if use_bf16 else jnp.float32
    eye = jnp.eye(pack, dtype=jnp.float32)

    def bd(wf):   # (out, in) -> block_diag(wf.T x pack): (pack*in, pack*out)
        return jnp.kron(eye, wf.T).astype(wdt)

    def bt(bf):   # (out,) -> (1, pack*out), kept f32 (added after f32 accumulation)
        return jnp.tile(bf, pack).reshape(1, -1).astype(jnp.float32)

    return (bd(w1f), bt(b1f), bd(w2f), bt(b2f),
            bd(w3f), bt(b3f), bd(w4f), bt(b4f))


def f_mlp_forward(uv, params, *, tn=8192, pack=PACK, use_bf16=True):
    """uv: (N, 2) float32 -> (N, 1) float32.  tn = samples per grid step."""
    N, F = uv.shape
    assert F == IN_FEATURES

    packed = pack_params(params, pack=pack, use_bf16=use_bf16)

    rows = pl.cdiv(N, pack)
    # Row tile: multiple of 8 sublanes, default 1024 rows (8192 samples) per step.
    tr = max(8, min((tn // pack // 8) * 8, pl.cdiv(rows, 8) * 8))
    rows_pad = pl.cdiv(rows, tr) * tr
    n_pad = rows_pad * pack

    # Contiguous packing (no transpose): (N,2) -> (rows_pad, pack*2).
    x = jnp.pad(uv.astype(jnp.float32), ((0, n_pad - N), (0, 0)))
    x = x.reshape(rows_pad, pack * IN_FEATURES)

    def full(a):  # whole-array block, resident across every grid step
        return pl.BlockSpec(a.shape, lambda i: (0,) * a.ndim)

    grid_spec = pltpu.PrefetchScalarGridSpec(
        num_scalar_prefetch=0,
        grid=(rows_pad // tr,),
        in_specs=[pl.BlockSpec((tr, pack * IN_FEATURES), lambda i: (i, 0))]
                 + [full(a) for a in packed],
        out_specs=pl.BlockSpec((tr, pack), lambda i: (i, 0)),
    )

    out = pl.pallas_call(
        _mlp_kernel,
        out_shape=jax.ShapeDtypeStruct((rows_pad, pack), jnp.float32),
        grid_spec=grid_spec,
        compiler_params=pltpu.CompilerParams(
            dimension_semantics=("parallel",)),
    )(x, *packed)

    # Contiguous un-packing back to (N, 1); padded samples sliced off.
    return out.reshape(n_pad, 1)[:N]


def init_params(key):
    """Deterministic synthetic init, shapes matching the nn.Linear layers of F_MLP:
    W (out, in), b (out,)."""
    dims = [IN_FEATURES] + LAYERS  # [2, 32, 32, 32, 1]
    params = []
    for din, dout in zip(dims[:-1], dims[1:]):
        kw, kb, key = jax.random.split(key, 3)
        bound = 1.0 / jnp.sqrt(float(din))
        w = jax.random.uniform(kw, (dout, din), jnp.float32, -bound, bound)
        b = jax.random.uniform(kb, (dout,), jnp.float32, -bound, bound)
        params.append((w, b))
    return params


def f_mlp_reference(uv, params):
    """Plain-JAX reference of the same forward pass (unfolded, f32)."""
    (w1, b1), (w2, b2), (w3, b3), (w4, b4) = params
    h = jax.nn.sigmoid(uv @ w1.T + b1.reshape(1, -1))
    h = jax.nn.sigmoid(h @ w2.T + b2.reshape(1, -1))
    h = jax.nn.sigmoid(h @ w3.T + b3.reshape(1, -1))
    return SCALE * (h @ w4.T + b4.reshape(1, -1))


if __name__ == "__main__":
    key = jax.random.PRNGKey(0)
    kuv, kparams = jax.random.split(key)

    N = 100  # small demo batch of (u, v) samples (exercises the pad/slice path)
    uv = jax.random.normal(kuv, (N, IN_FEATURES), jnp.float32)
    params = init_params(kparams)
    ref = f_mlp_reference(uv, params)

    # f32 dot path: tight check of the folded / block-diagonal-packed math.
    out_f32 = jax.block_until_ready(f_mlp_forward(uv, params, use_bf16=False))
    assert out_f32.shape == (N, 1)
    assert jnp.allclose(out_f32, ref, atol=5e-4, rtol=5e-4), "f32 path mismatch"

    # bf16 dot path (default / fast): f32 accumulation; loose tolerance because
    # the x200 output scale amplifies bf16 input rounding (~1% of the +-200 range).
    out = jax.block_until_ready(f_mlp_forward(uv, params))
    assert out.shape == (N, 1)
    assert jnp.allclose(out, ref, atol=2.0, rtol=2e-2), "bf16 path mismatch"

    print("KERNEL_OK")
</pallas_src>

<mosaic_0001>
module attributes {stable_mosaic.version = 11 : i64} {
  func.func @_mlp_kernel(%arg0: i32, %arg1: memref<16x16xf32, #tpu.memory_space<vmem>>, %arg2: memref<16x256xf32, #tpu.memory_space<vmem>>, %arg3: memref<1x256xf32, #tpu.memory_space<vmem>>, %arg4: memref<256x256xf32, #tpu.memory_space<vmem>>, %arg5: memref<1x256xf32, #tpu.memory_space<vmem>>, %arg6: memref<256x256xf32, #tpu.memory_space<vmem>>, %arg7: memref<1x256xf32, #tpu.memory_space<vmem>>, %arg8: memref<256x8xf32, #tpu.memory_space<vmem>>, %arg9: memref<1x8xf32, #tpu.memory_space<vmem>>, %arg10: memref<16x8xf32, #tpu.memory_space<vmem>>) attributes {dimension_semantics = [#tpu.dimension_semantics<parallel>], iteration_bounds = array<i64: 1>, scalar_prefetch = 0 : i64, scratch_operands = 0 : i64, tpu.core_type = #tpu.core_type<tc>, window_params = [{transform_indices = @transform_0, window_bounds = array<i64: 16, 16>}, {pipeline_mode = #tpu.pipeline_mode<synchronous>, transform_indices = @transform_1, window_bounds = array<i64: 16, 256>}, {pipeline_mode = #tpu.pipeline_mode<synchronous>, transform_indices = @transform_2, window_bounds = array<i64: 1, 256>}, {pipeline_mode = #tpu.pipeline_mode<synchronous>, transform_indices = @transform_3, window_bounds = array<i64: 256, 256>}, {pipeline_mode = #tpu.pipeline_mode<synchronous>, transform_indices = @transform_4, window_bounds = array<i64: 1, 256>}, {pipeline_mode = #tpu.pipeline_mode<synchronous>, transform_indices = @transform_5, window_bounds = array<i64: 256, 256>}, {pipeline_mode = #tpu.pipeline_mode<synchronous>, transform_indices = @transform_6, window_bounds = array<i64: 1, 256>}, {pipeline_mode = #tpu.pipeline_mode<synchronous>, transform_indices = @transform_7, window_bounds = array<i64: 256, 8>}, {pipeline_mode = #tpu.pipeline_mode<synchronous>, transform_indices = @transform_8, window_bounds = array<i64: 1, 8>}, {transform_indices = @transform_9, window_bounds = array<i64: 16, 8>}]} {
    %c0 = arith.constant 0 : index
    %c0_0 = arith.constant 0 : index
    %0 = vector.load %arg1[%c0, %c0_0] : memref<16x16xf32, #tpu.memory_space<vmem>>, vector<16x16xf32>
    %c0_1 = arith.constant 0 : index
    %c0_2 = arith.constant 0 : index
    %1 = vector.load %arg2[%c0_1, %c0_2] : memref<16x256xf32, #tpu.memory_space<vmem>>, vector<16x256xf32>
    %cst = arith.constant dense<0.000000e+00> : vector<16x256xf32>
    %2 = tpu.matmul %0, %1, %cst {dimension_numbers = #tpu.dot_dimension_numbers<[1], [0], [0], [1], [0, 0, 1, 1], [], []>} : vector<16x16xf32>, vector<16x256xf32>, vector<16x256xf32> -> vector<16x256xf32>
    %c0_3 = arith.constant 0 : index
    %c0_4 = arith.constant 0 : index
    %3 = vector.load %arg3[%c0_3, %c0_4] : memref<1x256xf32, #tpu.memory_space<vmem>>, vector<1x256xf32>
    %4 = vector.broadcast %3 : vector<1x256xf32> to vector<16x256xf32>
    %5 = arith.addf %2, %4 : vector<16x256xf32>
    %6 = math.tanh %5 : vector<16x256xf32>
    %c0_5 = arith.constant 0 : index
    %c0_6 = arith.constant 0 : index
    %7 = vector.load %arg4[%c0_5, %c0_6] : memref<256x256xf32, #tpu.memory_space<vmem>>, vector<256x256xf32>
    %cst_7 = arith.constant dense<0.000000e+00> : vector<16x256xf32>
    %8 = tpu.matmul %6, %7, %cst_7 {dimension_numbers = #tpu.dot_dimension_numbers<[1], [0], [0], [1], [0, 0, 1, 1], [], []>} : vector<16x256xf32>, vector<256x256xf32>, vector<16x256xf32> -> vector<16x256xf32>
    %c0_8 = arith.constant 0 : index
    %c0_9 = arith.constant 0 : index
    %9 = vector.load %arg5[%c0_8, %c0_9] : memref<1x256xf32, #tpu.memory_space<vmem>>, vector<1x256xf32>
    %10 = vector.broadcast %9 : vector<1x256xf32> to vector<16x256xf32>
    %11 = arith.addf %8, %10 : vector<16x256xf32>
    %12 = math.tanh %11 : vector<16x256xf32>
    %c0_10 = arith.constant 0 : index
    %c0_11 = arith.constant 0 : index
    %13 = vector.load %arg6[%c0_10, %c0_11] : memref<256x256xf32, #tpu.memory_space<vmem>>, vector<256x256xf32>
    %cst_12 = arith.constant dense<0.000000e+00> : vector<16x256xf32>
    %14 = tpu.matmul %12, %13, %cst_12 {dimension_numbers = #tpu.dot_dimension_numbers<[1], [0], [0], [1], [0, 0, 1, 1], [], []>} : vector<16x256xf32>, vector<256x256xf32>, vector<16x256xf32> -> vector<16x256xf32>
    %c0_13 = arith.constant 0 : index
    %c0_14 = arith.constant 0 : index
    %15 = vector.load %arg7[%c0_13, %c0_14] : memref<1x256xf32, #tpu.memory_space<vmem>>, vector<1x256xf32>
    %16 = vector.broadcast %15 : vector<1x256xf32> to vector<16x256xf32>
    %17 = arith.addf %14, %16 : vector<16x256xf32>
    %18 = math.tanh %17 : vector<16x256xf32>
    %c0_15 = arith.constant 0 : index
    %c0_16 = arith.constant 0 : index
    %19 = vector.load %arg8[%c0_15, %c0_16] : memref<256x8xf32, #tpu.memory_space<vmem>>, vector<256x8xf32>
    %cst_17 = arith.constant dense<0.000000e+00> : vector<16x8xf32>
    %20 = tpu.matmul %18, %19, %cst_17 {dimension_numbers = #tpu.dot_dimension_numbers<[1], [0], [0], [1], [0, 0, 1, 1], [], []>} : vector<16x256xf32>, vector<256x8xf32>, vector<16x8xf32> -> vector<16x8xf32>
    %c0_18 = arith.constant 0 : index
    %c0_19 = arith.constant 0 : index
    %21 = vector.load %arg9[%c0_18, %c0_19] : memref<1x8xf32, #tpu.memory_space<vmem>>, vector<1x8xf32>
    %22 = vector.broadcast %21 : vector<1x8xf32> to vector<16x8xf32>
    %23 = arith.addf %20, %22 : vector<16x8xf32>
    %c0_20 = arith.constant 0 : index
    %c0_21 = arith.constant 0 : index
    %24 = vector.load %arg10[%c0_20, %c0_21] : memref<16x8xf32, #tpu.memory_space<vmem>>, vector<16x8xf32>
    tpu.vector_store %arg10[%c0_20, %c0_21], %23 {strides = array<i32>} : memref<16x8xf32, #tpu.memory_space<vmem>>, vector<16x8xf32>,
    return
  }
  func.func @transform_0(%arg0: i32) -> (i32, i32) {
    %c0_i32 = arith.constant 0 : i32
    %c0_i32_0 = arith.constant 0 : i32
    return %arg0, %c0_i32 : i32, i32
  }
  func.func @transform_1(%arg0: i32) -> (i32, i32) {
    %c0_i32 = arith.constant 0 : i32
    %c0_i32_0 = arith.constant 0 : i32
    %c0_i32_1 = arith.constant 0 : i32
    return %c0_i32, %c0_i32_0 : i32, i32
  }
  func.func @transform_2(%arg0: i32) -> (i32, i32) {
    %c0_i32 = arith.constant 0 : i32
    %c0_i32_0 = arith.constant 0 : i32
    %c0_i32_1 = arith.constant 0 : i32
    return %c0_i32, %c0_i32_0 : i32, i32
  }
  func.func @transform_3(%arg0: i32) -> (i32, i32) {
    %c0_i32 = arith.constant 0 : i32
    %c0_i32_0 = arith.constant 0 : i32
    %c0_i32_1 = arith.constant 0 : i32
    return %c0_i32, %c0_i32_0 : i32, i32
  }
  func.func @transform_4(%arg0: i32) -> (i32, i32) {
    %c0_i32 = arith.constant 0 : i32
    %c0_i32_0 = arith.constant 0 : i32
    %c0_i32_1 = arith.constant 0 : i32
    return %c0_i32, %c0_i32_0 : i32, i32
  }
  func.func @transform_5(%arg0: i32) -> (i32, i32) {
    %c0_i32 = arith.constant 0 : i32
    %c0_i32_0 = arith.constant 0 : i32
    %c0_i32_1 = arith.constant 0 : i32
    return %c0_i32, %c0_i32_0 : i32, i32
  }
  func.func @transform_6(%arg0: i32) -> (i32, i32) {
    %c0_i32 = arith.constant 0 : i32
    %c0_i32_0 = arith.constant 0 : i32
    %c0_i32_1 = arith.constant 0 : i32
    return %c0_i32, %c0_i32_0 : i32, i32
  }
  func.func @transform_7(%arg0: i32) -> (i32, i32) {
    %c0_i32 = arith.constant 0 : i32
    %c0_i32_0 = arith.constant 0 : i32
    %c0_i32_1 = arith.constant 0 : i32
    return %c0_i32, %c0_i32_0 : i32, i32
  }
  func.func @transform_8(%arg0: i32) -> (i32, i32) {
    %c0_i32 = arith.constant 0 : i32
    %c0_i32_0 = arith.constant 0 : i32
    %c0_i32_1 = arith.constant 0 : i32
    return %c0_i32, %c0_i32_0 : i32, i32
  }
  func.func @transform_9(%arg0: i32) -> (i32, i32) {
    %c0_i32 = arith.constant 0 : i32
    %c0_i32_0 = arith.constant 0 : i32
    return %arg0, %c0_i32 : i32, i32
  }
}

</mosaic_0001>

<llo_original>
// kernel: tpu_custom_call.1
$region0: #{tpu_custom_call.1}
  #allocation0 [shape = 'u32[]', space=smem, size = 0x4, offset = 0x4, fixed_abs, tag = 'smem constant byte address 0x4 - core index']
  #allocation1 [shape = 'u32[144,128]{1,0:T(1,128)}', space=vmem, size = 0x12000, scoped, tag = 'internal scratch']
  %s0 = inlined_call_operand.vmem [shape: f32[16,16], index: 0, kind: input, shape index: {}]
  %s1 = inlined_call_operand.vmem [shape: f32[16,256], index: 1, kind: input, shape index: {}]
  %s2 = inlined_call_operand.vmem [shape: f32[1,256], index: 2, kind: input, shape index: {}]
  %s3 = inlined_call_operand.hbm [shape: f32[256,256], index: 3, kind: input, shape index: {}]
  %s4 = inlined_call_operand.vmem [shape: f32[1,256], index: 4, kind: input, shape index: {}]
  %s5 = inlined_call_operand.hbm [shape: f32[256,256], index: 5, kind: input, shape index: {}]
  %s6 = inlined_call_operand.vmem [shape: f32[1,256], index: 6, kind: input, shape index: {}]
  %s7 = inlined_call_operand.vmem [shape: f32[256,8], index: 7, kind: input, shape index: {}]
  %s8 = inlined_call_operand.vmem [shape: f32[1,8], index: 8, kind: input, shape index: {}]
  %s9 = inlined_call_operand.vmem [shape: f32[16,8], index: 9, kind: output, shape index: {}]
  %s10 = sld [smem:[#allocation0]]
  $region54: #{tpu_custom_call.1} parent=0
    _
  %s12 = ssub.s32 1, %s10
  %s13 = scalar_select 0, %s12, %s10
  $region1: #{tpu_custom_call.1} parent=0
    #allocation2 [shape = 'u8[262144]{0}', space=vmem, size = 0x40000, scoped, tag = 'input window, operand 3, single buffered']
    #allocation3 [shape = 's32[1]{0}', space=sflag, size = 0x4, scoped, tag = 'scoped memory for tpu_custom_call.1']
    #allocation4 [shape = 'u8[262144]{0}', space=vmem, size = 0x40000, scoped, tag = 'input window, operand 5, single buffered']
    #allocation5 [shape = 's32[1]{0}', space=sflag, size = 0x4, scoped, tag = 'scoped memory for tpu_custom_call.1']
    %14 = vsyncpa [#allocation3], 0
    %15 = vsyncpa [#allocation5], 0
    // Predicated region
    $region2: #{tpu_custom_call.1} parent=1 // pred_check
      _
    $region3: #{tpu_custom_call.1} parent=1 // pred_check_branch
      %17 = sbr.rel (0) target = $region5
    $region4: #{tpu_custom_call.1} parent=1 // pred_region
      _
    $region5: #{tpu_custom_call.1} parent=1 // pred_fallthru
      _
    // Predicated region
    $region6: #{tpu_custom_call.1} parent=1 // pred_check
      _
    $region7: #{tpu_custom_call.1} parent=1 // pred_check_branch
      %19 = sbr.rel (0) target = $region9
    $region8: #{tpu_custom_call.1} parent=1 // pred_region
      _
    $region9: #{tpu_custom_call.1} parent=1 // pred_fallthru
      _
    // Predicated region
    $region10: #{tpu_custom_call.1} parent=1 // pred_check
      _
    $region11: #{tpu_custom_call.1} parent=1 // pred_check_branch
      %21 = sbr.rel (0) target = $region13
    $region12: #{tpu_custom_call.1} parent=1 // pred_region
      _
    $region13: #{tpu_custom_call.1} parent=1 // pred_fallthru
      _
    // Predicated region
    $region14: #{tpu_custom_call.1} parent=1 // pred_check
      _
    $region15: #{tpu_custom_call.1} parent=1 // pred_check_branch
      %23 = sbr.rel (0) target = $region17
    $region16: #{tpu_custom_call.1} parent=1 // pred_region
      %s25 = ssub.s32 8192, 8192
      %26 = vsyncadd [#allocation3], %s25
      %s27 = sshll.u32 [#allocation2], 4
      %s28 = int_to_ptr.vmem [resolvable:$true] %s27
      %33 = dma.hbm_to_vmem [thread:$0]  %s3, 8192, %s28, [#allocation3], 256, 256, 16
    $region17: #{tpu_custom_call.1} parent=1 // pred_fallthru
      _
    // Predicated region
    $region18: #{tpu_custom_call.1} parent=1 // pred_check
      _
    $region19: #{tpu_custom_call.1} parent=1 // pred_check_branch
      %35 = sbr.rel (0) target = $region21
    $region20: #{tpu_custom_call.1} parent=1 // pred_region
      _
    $region21: #{tpu_custom_call.1} parent=1 // pred_fallthru
      _
    // Predicated region
    $region22: #{tpu_custom_call.1} parent=1 // pred_check
      _
    $region23: #{tpu_custom_call.1} parent=1 // pred_check_branch
      %37 = sbr.rel (0) target = $region25
    $region24: #{tpu_custom_call.1} parent=1 // pred_region
      %s39 = ssub.s32 8192, 8192
      %40 = vsyncadd [#allocation5], %s39
      %s41 = sshll.u32 [#allocation4], 4
      %s42 = int_to_ptr.vmem [resolvable:$true] %s41
      %47 = dma.hbm_to_vmem [thread:$0]  %s5, 8192, %s42, [#allocation5], 256, 256, 16
    $region25: #{tpu_custom_call.1} parent=1 // pred_fallthru
      _
    // Predicated region
    $region26: #{tpu_custom_call.1} parent=1 // pred_check
      _
    $region27: #{tpu_custom_call.1} parent=1 // pred_check_branch
      %49 = sbr.rel (0) target = $region29
    $region28: #{tpu_custom_call.1} parent=1 // pred_region
      _
    $region29: #{tpu_custom_call.1} parent=1 // pred_fallthru
      _
    // Predicated region
    $region30: #{tpu_custom_call.1} parent=1 // pred_check
      _
    $region31: #{tpu_custom_call.1} parent=1 // pred_check_branch
      %51 = sbr.rel (0) target = $region33
    $region32: #{tpu_custom_call.1} parent=1 // pred_region
      _
    $region33: #{tpu_custom_call.1} parent=1 // pred_fallthru
      _
    // Predicated region
    $region34: #{tpu_custom_call.1} parent=1 // pred_check
      _
    $region35: #{tpu_custom_call.1} parent=1 // pred_check_branch
      %53 = sbr.rel (0) target = $region37
    $region36: #{tpu_custom_call.1} parent=1 // pred_region
      _
    $region37: #{tpu_custom_call.1} parent=1 // pred_fallthru
      _
    // Predicated region
    $region38: #{tpu_custom_call.1} parent=1 // pred_check
      _
    $region39: #{tpu_custom_call.1} parent=1 // pred_check_branch
      %55 = sbr.rel (0) target = $region41
    $region40: #{tpu_custom_call.1} parent=1 // pred_region
      %56 = dma.done [#allocation3], 8192
    $region41: #{tpu_custom_call.1} parent=1 // pred_fallthru
      _
    // Predicated region
    $region42: #{tpu_custom_call.1} parent=1 // pred_check
      _
    $region43: #{tpu_custom_call.1} parent=1 // pred_check_branch
      %58 = sbr.rel (0) target = $region45
    $region44: #{tpu_custom_call.1} parent=1 // pred_region
      %59 = dma.done [#allocation5], 8192
    $region45: #{tpu_custom_call.1} parent=1 // pred_fallthru
      _
    %v60 = vld [vmem:[%s0] sm:$0xff]
    %v61 = vld [vmem:[%s0 + $0x8] sm:$0xff]
    %v62 = vld [vmem:[%s1] sm:$0xff]
    %v63 = vld [vmem:[%s1 + $0x8] sm:$0xff]
    %v64 = vld [vmem:[%s1 + $0x10] sm:$0xff]
    %v65 = vld [vmem:[%s1 + $0x18] sm:$0xff]
    %v66 = vld [vmem:[%s2] sm:$0x3]
    %v68 = vlaneseq
    %v69 = vshrl.u32 %v68, 7
    %v70 = vsub.s32 0, %v69
    %v71 = vrot.slane %v66, %v70
    %v72 = vlaneseq
    %v73 = vshrl.u32 %v72, 7
    %v74 = vsub.s32 1, %v73
    %v75 = vrot.slane %v66, %v74
    %vm78 = vcmask 130048
    %v80 = vsel %vm78, %v60, 0
    %v83 = vsel %vm78, %v61, 0
    %85 = vmatprep.subr.mxu0 0.0
    %86 = vmatpush1.msra.mxu0 0.0
    %87 = vmatprep.subr.mxu0 0.0
    %88 = vmatpush1.msra.mxu0 0.0
    %89 = vmatprep.subr.mxu0 0.0
    %90 = vmatpush1.msra.mxu0 0.0
    %91 = vmatprep.subr.mxu0 0.0
    %92 = vmatpush1.msra.mxu0 0.0
    %93 = vmatprep.subr.mxu0 0.0
    %94 = vmatpush1.msra.mxu0 0.0
    %95 = vmatprep.subr.mxu0 0.0
    %96 = vmatpush1.msra.mxu0 0.0
    %97 = vmatprep.subr.mxu0 0.0
    %98 = vmatpush1.msra.mxu0 0.0
    %99 = vmatprep.subr.mxu0 0.0
    %100 = vmatpush1.msra.mxu0 0.0
    %101 = vmatprep.subr.mxu0 0.0
    %102 = vmatpush1.msra.mxu0 0.0
    %103 = vmatprep.subr.mxu0 0.0
    %104 = vmatpush1.msra.mxu0 0.0
    %105 = vmatprep.subr.mxu0 0.0
    %106 = vmatpush1.msra.mxu0 0.0
    %107 = vmatprep.subr.mxu0 0.0
    %108 = vmatpush1.msra.mxu0 0.0
    %109 = vmatprep.subr.mxu0 0.0
    %110 = vmatpush1.msra.mxu0 0.0
    %111 = vmatprep.subr.mxu0 0.0
    %112 = vmatpush1.msra.mxu0 0.0
    %113 = vmatprep.subr.mxu0 %v65
    %114 = vmatpush1.msra.mxu0 %v64
    %115 = vmatprep.subr.mxu0 %v63
    %116 = vmatpush1.msra.mxu0 %v62
    %117 = vmatprep.subr.mxu0 0.0
    %118 = vmatpush2.msra.mxu0 0.0
    %119 = vmatprep.subr.mxu0 0.0
    %120 = vmatpush2.msra.mxu0 0.0
    %121 = vmatprep.subr.mxu0 0.0
    %122 = vmatpush2.msra.mxu0 0.0
    %123 = vmatprep.subr.mxu0 0.0
    %124 = vmatpush2.msra.mxu0 0.0
    %125 = vmatprep.subr.mxu0 0.0
    %126 = vmatpush2.msra.mxu0 0.0
    %127 = vmatprep.subr.mxu0 0.0
    %128 = vmatpush2.msra.mxu0 0.0
    %129 = vmatprep.subr.mxu0 0.0
    %130 = vmatpush2.msra.mxu0 0.0
    %131 = vmatprep.subr.mxu0 0.0
    %132 = vmatpush2.msra.mxu0 0.0
    %133 = vmatprep.subr.mxu0 0.0
    %134 = vmatpush2.msra.mxu0 0.0
    %135 = vmatprep.subr.mxu0 0.0
    %136 = vmatpush2.msra.mxu0 0.0
    %137 = vmatprep.subr.mxu0 0.0
    %138 = vmatpush2.msra.mxu0 0.0
    %139 = vmatprep.subr.mxu0 0.0
    %140 = vmatpush2.msra.mxu0 0.0
    %141 = vmatprep.subr.mxu0 0.0
    %142 = vmatpush2.msra.mxu0 0.0
    %143 = vmatprep.subr.mxu0 0.0
    %144 = vmatpush2.msra.mxu0 0.0
    %145 = vmatprep.subr.mxu0 0.0
    %146 = vmatpush2.msra.mxu0 0.0
    %147 = vmatprep.subr.mxu0 0.0
    %148 = vmatpush2.msra.mxu0 0.0
    %149 = vmatprep.mubr.f32.mxu0 0.0
    %150 = vmatmul.mubr.f32.gmra.mxu0 %v80
    %v151 = vpop.f32.mrf.mxu0
    %v152 = vadd.f32 %v71, %v151
    %v153 = vpop.f32.mrf.mxu0
    %v154 = vadd.f32 %v75, %v153
    %155 = vmatprep.mubr.f32.mxu0 0.0
    %156 = vmatmul.mubr.f32.gmra.mxu0 %v83
    %v157 = vpop.f32.mrf.mxu0
    %v158 = vadd.f32 %v71, %v157
    %v159 = vpop.f32.mrf.mxu0
    %v160 = vadd.f32 %v75, %v159
    %161 = vdwg.mxu0
    %v162 = vtanh.pop %v152
    %v163 = vtanh.pop %v154
    %v164 = vtanh.pop %v158
    %v165 = vtanh.pop %v160
    %v166 = vld [vmem:[#allocation2] sm:$0xff]
    %v167 = vld [vmem:[#allocation2 + $0x8] sm:$0xff]
    %v168 = vld [vmem:[#allocation2 + $0x10] sm:$0xff]
    %v169 = vld [vmem:[#allocation2 + $0x18] sm:$0xff]
    %v170 = vld [vmem:[#allocation2 + $0x20] sm:$0xff]
    %v171 = vld [vmem:[#allocation2 + $0x28] sm:$0xff]
    %v172 = vld [vmem:[#allocation2 + $0x30] sm:$0xff]
    %v173 = vld [vmem:[#allocation2 + $0x38] sm:$0xff]
    %v174 = vld [vmem:[#allocation2 + $0x40] sm:$0xff]
    %v175 = vld [vmem:[#allocation2 + $0x48] sm:$0xff]
    %v176 = vld [vmem:[#allocation2 + $0x50] sm:$0xff]
    %v177 = vld [vmem:[#allocation2 + $0x58] sm:$0xff]
    %v178 = vld [vmem:[#allocation2 + $0x60] sm:$0xff]
    %v179 = vld [vmem:[#allocation2 + $0x68] sm:$0xff]
    %v180 = vld [vmem:[#allocation2 + $0x70] sm:$0xff]
    %v181 = vld [vmem:[#allocation2 + $0x78] sm:$0xff]
    %v182 = vld [vmem:[#allocation2 + $0x80] sm:$0xff]
    %v183 = vld [vmem:[#allocation2 + $0x88] sm:$0xff]
    %v184 = vld [vmem:[#allocation2 + $0x90] sm:$0xff]
    %v185 = vld [vmem:[#allocation2 + $0x98] sm:$0xff]
    %v186 = vld [vmem:[#allocation2 + $0xa0] sm:$0xff]
    %v187 = vld [vmem:[#allocation2 + $0xa8] sm:$0xff]
    %v188 = vld [vmem:[#allocation2 + $0xb0] sm:$0xff]
    %v189 = vld [vmem:[#allocation2 + $0xb8] sm:$0xff]
    %v190 = vld [vmem:[#allocation2 + $0xc0] sm:$0xff]
    %v191 = vld [vmem:[#allocation2 + $0xc8] sm:$0xff]
    %v192 = vld [vmem:[#allocation2 + $0xd0] sm:$0xff]
    %v193 = vld [vmem:[#allocation2 + $0xd8] sm:$0xff]
    %v194 = vld [vmem:[#allocation2 + $0xe0] sm:$0xff]
    %v195 = vld [vmem:[#allocation2 + $0xe8] sm:$0xff]
    %v196 = vld [vmem:[#allocation2 + $0xf0] sm:$0xff]
    %v197 = vld [vmem:[#allocation2 + $0xf8] sm:$0xff]
    %v198 = vld [vmem:[#allocation2 + $0x100] sm:$0xff]
    %v199 = vld [vmem:[#allocation2 + $0x108] sm:$0xff]
    %v200 = vld [vmem:[#allocation2 + $0x110] sm:$0xff]
    %v201 = vld [vmem:[#allocation2 + $0x118] sm:$0xff]
    %v202 = vld [vmem:[#allocation2 + $0x120] sm:$0xff]
    %v203 = vld [vmem:[#allocation2 + $0x128] sm:$0xff]
    %v204 = vld [vmem:[#allocation2 + $0x130] sm:$0xff]
    %v205 = vld [vmem:[#allocation2 + $0x138] sm:$0xff]
    %v206 = vld [vmem:[#allocation2 + $0x140] sm:$0xff]
    %v207 = vld [vmem:[#allocation2 + $0x148] sm:$0xff]
    %v208 = vld [vmem:[#allocation2 + $0x150] sm:$0xff]
    %v209 = vld [vmem:[#allocation2 + $0x158] sm:$0xff]
    %v210 = vld [vmem:[#allocation2 + $0x160] sm:$0xff]
    %v211 = vld [vmem:[#allocation2 + $0x168] sm:$0xff]
    %v212 = vld [vmem:[#allocation2 + $0x170] sm:$0xff]
    %v213 = vld [vmem:[#allocation2 + $0x178] sm:$0xff]
    %v214 = vld [vmem:[#allocation2 + $0x180] sm:$0xff]
    %v215 = vld [vmem:[#allocation2 + $0x188] sm:$0xff]
    %v216 = vld [vmem:[#allocation2 + $0x190] sm:$0xff]
    %v217 = vld [vmem:[#allocation2 + $0x198] sm:$0xff]
    %v218 = vld [vmem:[#allocation2 + $0x1a0] sm:$0xff]
    %v219 = vld [vmem:[#allocation2 + $0x1a8] sm:$0xff]
    %v220 = vld [vmem:[#allocation2 + $0x1b0] sm:$0xff]
    %v221 = vld [vmem:[#allocation2 + $0x1b8] sm:$0xff]
    %v222 = vld [vmem:[#allocation2 + $0x1c0] sm:$0xff]
    %v223 = vld [vmem:[#allocation2 + $0x1c8] sm:$0xff]
    %v224 = vld [vmem:[#allocation2 + $0x1d0] sm:$0xff]
    %v225 = vld [vmem:[#allocation2 + $0x1d8] sm:$0xff]
    %v226 = vld [vmem:[#allocation2 + $0x1e0] sm:$0xff]
    %v227 = vld [vmem:[#allocation2 + $0x1e8] sm:$0xff]
    %v228 = vld [vmem:[#allocation2 + $0x1f0] sm:$0xff]
    %v229 = vld [vmem:[#allocation2 + $0x1f8] sm:$0xff]
    %v230 = vld [vmem:[%s4] sm:$0x3]
    %v232 = vlaneseq
    %v233 = vshrl.u32 %v232, 7
    %v234 = vsub.s32 0, %v233
    %v235 = vrot.slane %v230, %v234
    %v236 = vlaneseq
    %v237 = vshrl.u32 %v236, 7
    %v238 = vsub.s32 1, %v237
    %v239 = vrot.slane %v230, %v238
    %242 = vmatprep.subr.mxu0 %v197
    %243 = vmatpush1.msra.mxu0 %v196
    %244 = vmatprep.subr.mxu0 %v195
    %245 = vmatpush1.msra.mxu0 %v194
    %246 = vmatprep.subr.mxu0 %v193
    %247 = vmatpush1.msra.mxu0 %v192
    %248 = vmatprep.subr.mxu0 %v191
    %249 = vmatpush1.msra.mxu0 %v190
    %250 = vmatprep.subr.mxu0 %v189
    %251 = vmatpush1.msra.mxu0 %v188
    %252 = vmatprep.subr.mxu0 %v187
    %253 = vmatpush1.msra.mxu0 %v186
    %254 = vmatprep.subr.mxu0 %v185
    %255 = vmatpush1.msra.mxu0 %v184
    %256 = vmatprep.subr.mxu0 %v183
    %257 = vmatpush1.msra.mxu0 %v182
    %258 = vmatprep.subr.mxu0 %v181
    %259 = vmatpush1.msra.mxu0 %v180
    %260 = vmatprep.subr.mxu0 %v179
    %261 = vmatpush1.msra.mxu0 %v178
    %262 = vmatprep.subr.mxu0 %v177
    %263 = vmatpush1.msra.mxu0 %v176
    %264 = vmatprep.subr.mxu0 %v175
    %265 = vmatpush1.msra.mxu0 %v174
    %266 = vmatprep.subr.mxu0 %v173
    %267 = vmatpush1.msra.mxu0 %v172
    %268 = vmatprep.subr.mxu0 %v171
    %269 = vmatpush1.msra.mxu0 %v170
    %270 = vmatprep.subr.mxu0 %v169
    %271 = vmatpush1.msra.mxu0 %v168
    %272 = vmatprep.subr.mxu0 %v167
    %273 = vmatpush1.msra.mxu0 %v166
    %274 = vmatprep.subr.mxu0 %v229
    %275 = vmatpush2.msra.mxu0 %v228
    %276 = vmatprep.subr.mxu0 %v227
    %277 = vmatpush2.msra.mxu0 %v226
    %278 = vmatprep.subr.mxu0 %v225
    %279 = vmatpush2.msra.mxu0 %v224
    %280 = vmatprep.subr.mxu0 %v223
    %281 = vmatpush2.msra.mxu0 %v222
    %282 = vmatprep.subr.mxu0 %v221
    %283 = vmatpush2.msra.mxu0 %v220
    %284 = vmatprep.subr.mxu0 %v219
    %285 = vmatpush2.msra.mxu0 %v218
    %286 = vmatprep.subr.mxu0 %v217
    %287 = vmatpush2.msra.mxu0 %v216
    %288 = vmatprep.subr.mxu0 %v215
    %289 = vmatpush2.msra.mxu0 %v214
    %290 = vmatprep.subr.mxu0 %v213
    %291 = vmatpush2.msra.mxu0 %v212
    %292 = vmatprep.subr.mxu0 %v211
    %293 = vmatpush2.msra.mxu0 %v210
    %294 = vmatprep.subr.mxu0 %v209
    %295 = vmatpush2.msra.mxu0 %v208
    %296 = vmatprep.subr.mxu0 %v207
    %297 = vmatpush2.msra.mxu0 %v206
    %298 = vmatprep.subr.mxu0 %v205
    %299 = vmatpush2.msra.mxu0 %v204
    %300 = vmatprep.subr.mxu0 %v203
    %301 = vmatpush2.msra.mxu0 %v202
    %302 = vmatprep.subr.mxu0 %v201
    %303 = vmatpush2.msra.mxu0 %v200
    %304 = vmatprep.subr.mxu0 %v199
    %305 = vmatpush2.msra.mxu0 %v198
    %306 = vmatprep.mubr.f32.mxu0 %v163
    %307 = vmatmul.mubr.f32.gmra.mxu0 %v162
    %v308 = vpop.f32.mrf.mxu0
    %v309 = vadd.f32 %v235, %v308
    %v310 = vpop.f32.mrf.mxu0
    %v311 = vadd.f32 %v239, %v310
    %312 = vmatprep.mubr.f32.mxu0 %v165
    %313 = vmatmul.mubr.f32.gmra.mxu0 %v164
    %v314 = vpop.f32.mrf.mxu0
    %v315 = vadd.f32 %v235, %v314
    %v316 = vpop.f32.mrf.mxu0
    %v317 = vadd.f32 %v239, %v316
    %318 = vdwg.mxu0
    %v319 = vtanh.pop %v309
    %v320 = vtanh.pop %v311
    %v321 = vtanh.pop %v315
    %v322 = vtanh.pop %v317
    %v323 = vld [vmem:[#allocation4] sm:$0xff]
    %v324 = vld [vmem:[#allocation4 + $0x8] sm:$0xff]
    %v325 = vld [vmem:[#allocation4 + $0x10] sm:$0xff]
    %v326 = vld [vmem:[#allocation4 + $0x18] sm:$0xff]
    %v327 = vld [vmem:[#allocation4 + $0x20] sm:$0xff]
    %v328 = vld [vmem:[#allocation4 + $0x28] sm:$0xff]
    %v329 = vld [vmem:[#allocation4 + $0x30] sm:$0xff]
    %v330 = vld [vmem:[#allocation4 + $0x38] sm:$0xff]
    %v331 = vld [vmem:[#allocation4 + $0x40] sm:$0xff]
    %v332 = vld [vmem:[#allocation4 + $0x48] sm:$0xff]
    %v333 = vld [vmem:[#allocation4 + $0x50] sm:$0xff]
    %v334 = vld [vmem:[#allocation4 + $0x58] sm:$0xff]
    %v335 = vld [vmem:[#allocation4 + $0x60] sm:$0xff]
    %v336 = vld [vmem:[#allocation4 + $0x68] sm:$0xff]
    %v337 = vld [vmem:[#allocation4 + $0x70] sm:$0xff]
    %v338 = vld [vmem:[#allocation4 + $0x78] sm:$0xff]
    %v339 = vld [vmem:[#allocation4 + $0x80] sm:$0xff]
    %v340 = vld [vmem:[#allocation4 + $0x88] sm:$0xff]
    %v341 = vld [vmem:[#allocation4 + $0x90] sm:$0xff]
    %v342 = vld [vmem:[#allocation4 + $0x98] sm:$0xff]
    %v343 = vld [vmem:[#allocation4 + $0xa0] sm:$0xff]
    %v344 = vld [vmem:[#allocation4 + $0xa8] sm:$0xff]
    %v345 = vld [vmem:[#allocation4 + $0xb0] sm:$0xff]
    %v346 = vld [vmem:[#allocation4 + $0xb8] sm:$0xff]
    %v347 = vld [vmem:[#allocation4 + $0xc0] sm:$0xff]
    %v348 = vld [vmem:[#allocation4 + $0xc8] sm:$0xff]
    %v349 = vld [vmem:[#allocation4 + $0xd0] sm:$0xff]
    %v350 = vld [vmem:[#allocation4 + $0xd8] sm:$0xff]
    %v351 = vld [vmem:[#allocation4 + $0xe0] sm:$0xff]
    %v352 = vld [vmem:[#allocation4 + $0xe8] sm:$0xff]
    %v353 = vld [vmem:[#allocation4 + $0xf0] sm:$0xff]
    %v354 = vld [vmem:[#allocation4 + $0xf8] sm:$0xff]
    %v355 = vld [vmem:[#allocation4 + $0x100] sm:$0xff]
    %v356 = vld [vmem:[#allocation4 + $0x108] sm:$0xff]
    %v357 = vld [vmem:[#allocation4 + $0x110] sm:$0xff]
    %v358 = vld [vmem:[#allocation4 + $0x118] sm:$0xff]
    %v359 = vld [vmem:[#allocation4 + $0x120] sm:$0xff]
    %v360 = vld [vmem:[#allocation4 + $0x128] sm:$0xff]
    %v361 = vld [vmem:[#allocation4 + $0x130] sm:$0xff]
    %v362 = vld [vmem:[#allocation4 + $0x138] sm:$0xff]
    %v363 = vld [vmem:[#allocation4 + $0x140] sm:$0xff]
    %v364 = vld [vmem:[#allocation4 + $0x148] sm:$0xff]
    %v365 = vld [vmem:[#allocation4 + $0x150] sm:$0xff]
    %v366 = vld [vmem:[#allocation4 + $0x158] sm:$0xff]
    %v367 = vld [vmem:[#allocation4 + $0x160] sm:$0xff]
    %v368 = vld [vmem:[#allocation4 + $0x168] sm:$0xff]
    %v369 = vld [vmem:[#allocation4 + $0x170] sm:$0xff]
    %v370 = vld [vmem:[#allocation4 + $0x178] sm:$0xff]
    %v371 = vld [vmem:[#allocation4 + $0x180] sm:$0xff]
    %v372 = vld [vmem:[#allocation4 + $0x188] sm:$0xff]
    %v373 = vld [vmem:[#allocation4 + $0x190] sm:$0xff]
    %v374 = vld [vmem:[#allocation4 + $0x198] sm:$0xff]
    %v375 = vld [vmem:[#allocation4 + $0x1a0] sm:$0xff]
    %v376 = vld [vmem:[#allocation4 + $0x1a8] sm:$0xff]
    %v377 = vld [vmem:[#allocation4 + $0x1b0] sm:$0xff]
    %v378 = vld [vmem:[#allocation4 + $0x1b8] sm:$0xff]
    %v379 = vld [vmem:[#allocation4 + $0x1c0] sm:$0xff]
    %v380 = vld [vmem:[#allocation4 + $0x1c8] sm:$0xff]
    %v381 = vld [vmem:[#allocation4 + $0x1d0] sm:$0xff]
    %v382 = vld [vmem:[#allocation4 + $0x1d8] sm:$0xff]
    %v383 = vld [vmem:[#allocation4 + $0x1e0] sm:$0xff]
    %v384 = vld [vmem:[#allocation4 + $0x1e8] sm:$0xff]
    %v385 = vld [vmem:[#allocation4 + $0x1f0] sm:$0xff]
    %v386 = vld [vmem:[#allocation4 + $0x1f8] sm:$0xff]
    %v387 = vld [vmem:[%s6] sm:$0x3]
    %v389 = vlaneseq
    %v390 = vshrl.u32 %v389, 7
    %v391 = vsub.s32 0, %v390
    %v392 = vrot.slane %v387, %v391
    %v393 = vlaneseq
    %v394 = vshrl.u32 %v393, 7
    %v395 = vsub.s32 1, %v394
    %v396 = vrot.slane %v387, %v395
    %399 = vmatprep.subr.mxu0 %v354
    %400 = vmatpush1.msra.mxu0 %v353
    %401 = vmatprep.subr.mxu0 %v352
    %402 = vmatpush1.msra.mxu0 %v351
    %403 = vmatprep.subr.mxu0 %v350
    %404 = vmatpush1.msra.mxu0 %v349
    %405 = vmatprep.subr.mxu0 %v348
    %406 = vmatpush1.msra.mxu0 %v347
    %407 = vmatprep.subr.mxu0 %v346
    %408 = vmatpush1.msra.mxu0 %v345
    %409 = vmatprep.subr.mxu0 %v344
    %410 = vmatpush1.msra.mxu0 %v343
    %411 = vmatprep.subr.mxu0 %v342
    %412 = vmatpush1.msra.mxu0 %v341
    %413 = vmatprep.subr.mxu0 %v340
    %414 = vmatpush1.msra.mxu0 %v339
    %415 = vmatprep.subr.mxu0 %v338
    %416 = vmatpush1.msra.mxu0 %v337
    %417 = vmatprep.subr.mxu0 %v336
    %418 = vmatpush1.msra.mxu0 %v335
    %419 = vmatprep.subr.mxu0 %v334
    %420 = vmatpush1.msra.mxu0 %v333
    %421 = vmatprep.subr.mxu0 %v332
    %422 = vmatpush1.msra.mxu0 %v331
    %423 = vmatprep.subr.mxu0 %v330
    %424 = vmatpush1.msra.mxu0 %v329
    %425 = vmatprep.subr.mxu0 %v328
    %426 = vmatpush1.msra.mxu0 %v327
    %427 = vmatprep.subr.mxu0 %v326
    %428 = vmatpush1.msra.mxu0 %v325
    %429 = vmatprep.subr.mxu0 %v324
    %430 = vmatpush1.msra.mxu0 %v323
    %431 = vmatprep.subr.mxu0 %v386
    %432 = vmatpush2.msra.mxu0 %v385
    %433 = vmatprep.subr.mxu0 %v384
    %434 = vmatpush2.msra.mxu0 %v383
    %435 = vmatprep.subr.mxu0 %v382
    %436 = vmatpush2.msra.mxu0 %v381
    %437 = vmatprep.subr.mxu0 %v380
    %438 = vmatpush2.msra.mxu0 %v379
    %439 = vmatprep.subr.mxu0 %v378
    %440 = vmatpush2.msra.mxu0 %v377
    %441 = vmatprep.subr.mxu0 %v376
    %442 = vmatpush2.msra.mxu0 %v375
    %443 = vmatprep.subr.mxu0 %v374
    %444 = vmatpush2.msra.mxu0 %v373
    %445 = vmatprep.subr.mxu0 %v372
    %446 = vmatpush2.msra.mxu0 %v371
    %447 = vmatprep.subr.mxu0 %v370
    %448 = vmatpush2.msra.mxu0 %v369
    %449 = vmatprep.subr.mxu0 %v368
    %450 = vmatpush2.msra.mxu0 %v367
    %451 = vmatprep.subr.mxu0 %v366
    %452 = vmatpush2.msra.mxu0 %v365
    %453 = vmatprep.subr.mxu0 %v364
    %454 = vmatpush2.msra.mxu0 %v363
    %455 = vmatprep.subr.mxu0 %v362
    %456 = vmatpush2.msra.mxu0 %v361
    %457 = vmatprep.subr.mxu0 %v360
    %458 = vmatpush2.msra.mxu0 %v359
    %459 = vmatprep.subr.mxu0 %v358
    %460 = vmatpush2.msra.mxu0 %v357
    %461 = vmatprep.subr.mxu0 %v356
    %462 = vmatpush2.msra.mxu0 %v355
    %463 = vmatprep.mubr.f32.mxu0 %v320
    %464 = vmatmul.mubr.f32.gmra.mxu0 %v319
    %v465 = vpop.f32.mrf.mxu0
    %v466 = vadd.f32 %v392, %v465
    %v467 = vpop.f32.mrf.mxu0
    %v468 = vadd.f32 %v396, %v467
    %469 = vmatprep.mubr.f32.mxu0 %v322
    %470 = vmatmul.mubr.f32.gmra.mxu0 %v321
    %v471 = vpop.f32.mrf.mxu0
    %v472 = vadd.f32 %v392, %v471
    %v473 = vpop.f32.mrf.mxu0
    %v474 = vadd.f32 %v396, %v473
    %475 = vdwg.mxu0
    %v476 = vtanh.pop %v466
    %v477 = vtanh.pop %v468
    %v478 = vtanh.pop %v472
    %v479 = vtanh.pop %v474
    %v480 = vld [vmem:[%s7] sm:$0xff]
    %v481 = vld [vmem:[%s7 + $0x8] sm:$0xff]
    %v482 = vld [vmem:[%s7 + $0x10] sm:$0xff]
    %v483 = vld [vmem:[%s7 + $0x18] sm:$0xff]
    %v484 = vld [vmem:[%s7 + $0x20] sm:$0xff]
    %v485 = vld [vmem:[%s7 + $0x28] sm:$0xff]
    %v486 = vld [vmem:[%s7 + $0x30] sm:$0xff]
    %v487 = vld [vmem:[%s7 + $0x38] sm:$0xff]
    %v488 = vld [vmem:[%s7 + $0x40] sm:$0xff]
    %v489 = vld [vmem:[%s7 + $0x48] sm:$0xff]
    %v490 = vld [vmem:[%s7 + $0x50] sm:$0xff]
    %v491 = vld [vmem:[%s7 + $0x58] sm:$0xff]
    %v492 = vld [vmem:[%s7 + $0x60] sm:$0xff]
    %v493 = vld [vmem:[%s7 + $0x68] sm:$0xff]
    %v494 = vld [vmem:[%s7 + $0x70] sm:$0xff]
    %v495 = vld [vmem:[%s7 + $0x78] sm:$0xff]
    %v496 = vld [vmem:[%s7 + $0x80] sm:$0xff]
    %v497 = vld [vmem:[%s7 + $0x88] sm:$0xff]
    %v498 = vld [vmem:[%s7 + $0x90] sm:$0xff]
    %v499 = vld [vmem:[%s7 + $0x98] sm:$0xff]
    %v500 = vld [vmem:[%s7 + $0xa0] sm:$0xff]
    %v501 = vld [vmem:[%s7 + $0xa8] sm:$0xff]
    %v502 = vld [vmem:[%s7 + $0xb0] sm:$0xff]
    %v503 = vld [vmem:[%s7 + $0xb8] sm:$0xff]
    %v504 = vld [vmem:[%s7 + $0xc0] sm:$0xff]
    %v505 = vld [vmem:[%s7 + $0xc8] sm:$0xff]
    %v506 = vld [vmem:[%s7 + $0xd0] sm:$0xff]
    %v507 = vld [vmem:[%s7 + $0xd8] sm:$0xff]
    %v508 = vld [vmem:[%s7 + $0xe0] sm:$0xff]
    %v509 = vld [vmem:[%s7 + $0xe8] sm:$0xff]
    %v510 = vld [vmem:[%s7 + $0xf0] sm:$0xff]
    %v511 = vld [vmem:[%s7 + $0xf8] sm:$0xff]
    %v512 = vld [vmem:[%s8] sm:$0x1]
    %v514 = vlaneseq
    %v515 = vshrl.u32 %v514, 7
    %v516 = vsub.s32 0, %v515
    %v517 = vrot.slane %v512, %v516
    %519 = vmatprep.subr.mxu0 0.0
    %520 = vmatpush1.msra.mxu0 %v495
    %521 = vmatprep.subr.mxu0 0.0
    %522 = vmatpush1.msra.mxu0 %v494
    %523 = vmatprep.subr.mxu0 0.0
    %524 = vmatpush1.msra.mxu0 %v493
    %525 = vmatprep.subr.mxu0 0.0
    %526 = vmatpush1.msra.mxu0 %v492
    %527 = vmatprep.subr.mxu0 0.0
    %528 = vmatpush1.msra.mxu0 %v491
    %529 = vmatprep.subr.mxu0 0.0
    %530 = vmatpush1.msra.mxu0 %v490
    %531 = vmatprep.subr.mxu0 0.0
    %532 = vmatpush1.msra.mxu0 %v489
    %533 = vmatprep.subr.mxu0 0.0
    %534 = vmatpush1.msra.mxu0 %v488
    %535 = vmatprep.subr.mxu0 0.0
    %536 = vmatpush1.msra.mxu0 %v487
    %537 = vmatprep.subr.mxu0 0.0
    %538 = vmatpush1.msra.mxu0 %v486
    %539 = vmatprep.subr.mxu0 0.0
    %540 = vmatpush1.msra.mxu0 %v485
    %541 = vmatprep.subr.mxu0 0.0
    %542 = vmatpush1.msra.mxu0 %v484
    %543 = vmatprep.subr.mxu0 0.0
    %544 = vmatpush1.msra.mxu0 %v483
    %545 = vmatprep.subr.mxu0 0.0
    %546 = vmatpush1.msra.mxu0 %v482
    %547 = vmatprep.subr.mxu0 0.0
    %548 = vmatpush1.msra.mxu0 %v481
    %549 = vmatprep.subr.mxu0 0.0
    %550 = vmatpush1.msra.mxu0 %v480
    %551 = vmatprep.subr.mxu0 0.0
    %552 = vmatpush2.msra.mxu0 %v511
    %553 = vmatprep.subr.mxu0 0.0
    %554 = vmatpush2.msra.mxu0 %v510
    %555 = vmatprep.subr.mxu0 0.0
    %556 = vmatpush2.msra.mxu0 %v509
    %557 = vmatprep.subr.mxu0 0.0
    %558 = vmatpush2.msra.mxu0 %v508
    %559 = vmatprep.subr.mxu0 0.0
    %560 = vmatpush2.msra.mxu0 %v507
    %561 = vmatprep.subr.mxu0 0.0
    %562 = vmatpush2.msra.mxu0 %v506
    %563 = vmatprep.subr.mxu0 0.0
    %564 = vmatpush2.msra.mxu0 %v505
    %565 = vmatprep.subr.mxu0 0.0
    %566 = vmatpush2.msra.mxu0 %v504
    %567 = vmatprep.subr.mxu0 0.0
    %568 = vmatpush2.msra.mxu0 %v503
    %569 = vmatprep.subr.mxu0 0.0
    %570 = vmatpush2.msra.mxu0 %v502
    %571 = vmatprep.subr.mxu0 0.0
    %572 = vmatpush2.msra.mxu0 %v501
    %573 = vmatprep.subr.mxu0 0.0
    %574 = vmatpush2.msra.mxu0 %v500
    %575 = vmatprep.subr.mxu0 0.0
    %576 = vmatpush2.msra.mxu0 %v499
    %577 = vmatprep.subr.mxu0 0.0
    %578 = vmatpush2.msra.mxu0 %v498
    %579 = vmatprep.subr.mxu0 0.0
    %580 = vmatpush2.msra.mxu0 %v497
    %581 = vmatprep.subr.mxu0 0.0
    %582 = vmatpush2.msra.mxu0 %v496
    %583 = vmatprep.mubr.f32.mxu0 %v477
    %584 = vmatmul.mubr.f32.gmra.mxu0 %v476
    %v585 = vpop.f32.mrf.mxu0
    %v586 = vadd.f32 %v517, %v585
    %v587 = vpop.f32.mrf.mxu0
    %588 = vmatprep.mubr.f32.mxu0 %v479
    %589 = vmatmul.mubr.f32.gmra.mxu0 %v478
    %v590 = vpop.f32.mrf.mxu0
    %v591 = vadd.f32 %v517, %v590
    %v592 = vpop.f32.mrf.mxu0
    %593 = vdwg.mxu0
    %vm594 = vcmask 64512
    %595 = vst.msk [vmem:[%s9] sm:$0xff] %vm594, %v586
    %596 = vst.msk [vmem:[%s9 + $0x8] sm:$0xff] %vm594, %v591
    // Predicated region
    $region46: #{tpu_custom_call.1} parent=1 // pred_check
      _
    $region47: #{tpu_custom_call.1} parent=1 // pred_check_branch
      %598 = sbr.rel (0) target = $region49
    $region48: #{tpu_custom_call.1} parent=1 // pred_region
      _
    $region49: #{tpu_custom_call.1} parent=1 // pred_fallthru
      _
    // Predicated region
    $region50: #{tpu_custom_call.1} parent=1 // pred_check
      _
    $region51: #{tpu_custom_call.1} parent=1 // pred_check_branch
      %600 = sbr.rel (0) target = $region53
    $region52: #{tpu_custom_call.1} parent=1 // pred_region
      _
    $region53: #{tpu_custom_call.1} parent=1 // pred_fallthru
      _
    %601 = vsyncpa [#allocation3], 1
    %602 = vsyncpa [#allocation5], 1

</llo_original>
